<compile_context>
chip_gen: v7x
topology: tpu7x:2x2x1
jax: 0.10.0
libtpu: 0.0.40
codegen_flags: <defaults>
</compile_context>

<pallas_src>
import functools

import jax
import jax.numpy as jnp
from jax.experimental import pallas as pl
from jax.experimental.pallas import tpu as pltpu


def _genre_encoder_kernel(x_ref, w1_ref, b1_ref, w2_ref, b2_ref, o_ref):
    # x_ref: (3, TB) batch-on-lanes; w1: (18, 3) bf16; b1: (18, 1) f32;
    # w2: (6, 18) bf16; b2: (6, 1) f32.  MXU operands bf16, accumulation f32.
    x = x_ref[...].astype(jnp.bfloat16)
    h = jnp.dot(w1_ref[...], x, preferred_element_type=jnp.float32) + b1_ref[...]
    h = jnp.maximum(h, 0.0)                                   # ReLU (VPU, f32)
    out = jnp.dot(w2_ref[...], h.astype(jnp.bfloat16),
                  preferred_element_type=jnp.float32) + b2_ref[...]
    o_ref[...] = out.astype(o_ref.dtype)


def genre_encoder_t(x_t, w1, b1, w2, b2, *, block_b=32768, out_dtype=None):
    """Lane-dense entry point. x_t: (3, B); weights in nn.Linear (out, in) layout.

    Returns (6, B) in `out_dtype` (defaults to x_t.dtype). f32 accumulation, bf16 MXU
    operands inside the kernel.
    """
    in_dim, batch = x_t.shape
    assert in_dim == 3, "genreEncoder expects 3 input features"
    if out_dtype is None:
        out_dtype = x_t.dtype

    # Batch tile: full array for small B (block == full dims is always legal),
    # otherwise a lane-aligned (multiple of 128) tile; ragged last block handled by Pallas.
    if batch <= block_b:
        tb = batch
    else:
        tb = max(128, (min(block_b, batch) // 128) * 128)
    n_blocks = pl.cdiv(batch, tb)

    # Params: bf16 weights (MXU operands), f32 biases (added to the f32 accumulator).
    w1c = w1.astype(jnp.bfloat16)                    # (18, 3)
    b1c = b1.reshape(18, 1).astype(jnp.float32)      # broadcast over lanes
    w2c = w2.astype(jnp.bfloat16)                    # (6, 18)
    b2c = b2.reshape(6, 1).astype(jnp.float32)

    in_bytes = jnp.dtype(x_t.dtype).itemsize
    out_bytes = jnp.dtype(out_dtype).itemsize

    # VMEM budget per batch column (sublane-padded tiles):
    #   x tile dbuf 2*8*in_bytes, out tile dbuf 2*8*out_bytes, bf16 x cast 16*2,
    #   f32 h (18->24 sublanes) 24*4, bf16 h cast (18->32) 32*2, f32 pre-cast out 8*4.
    per_col = 2 * 8 * in_bytes + 2 * 8 * out_bytes + 16 * 2 + 24 * 4 + 32 * 2 + 8 * 4
    vmem_limit = max(32 << 20, min(48 << 20, (per_col * tb * 5) // 4 + (2 << 20)))

    cost = pl.CostEstimate(
        flops=2 * (18 * 3 + 6 * 18) * batch,          # 324 flops / batch column
        transcendentals=0,
        bytes_accessed=batch * (3 * in_bytes + 6 * out_bytes)
        + (18 * 3 + 6 * 18) * 2 + (18 + 6) * 4,
    )

    out_t = pl.pallas_call(
        _genre_encoder_kernel,
        out_shape=jax.ShapeDtypeStruct((6, batch), out_dtype),
        grid=(n_blocks,),
        in_specs=[
            pl.BlockSpec((3, tb), lambda i: (0, i)),     # x tile marches over the batch
            pl.BlockSpec((18, 3), lambda i: (0, 0)),     # weights/biases: constant index
            pl.BlockSpec((18, 1), lambda i: (0, 0)),     #   map -> fetched once, resident
            pl.BlockSpec((6, 18), lambda i: (0, 0)),
            pl.BlockSpec((6, 1), lambda i: (0, 0)),
        ],
        out_specs=pl.BlockSpec((6, tb), lambda i: (0, i)),
        compiler_params=pltpu.CompilerParams(
            dimension_semantics=("parallel",),           # megacore sharding on v7x
            vmem_limit_bytes=int(vmem_limit),
        ),
        cost_estimate=cost,
    )(x_t, w1c, b1c, w2c, b2c)

    return out_t


@functools.partial(jax.jit, static_argnames=("block_b", "out_dtype"))
def genre_encoder(x, w1, b1, w2, b2, *, block_b=32768, out_dtype=None):
    """PyTorch-layout wrapper: x (B, 3) -> (B, 6), weights in nn.Linear (out, in) layout.

    NOTE: the x.T / out.T here are full XLA transpose passes over HBM; prefer
    genre_encoder_t (batch-on-lanes (3, B) -> (6, B)) when the caller controls layout.
    """
    out_t = genre_encoder_t(x.T, w1, b1, w2, b2, block_b=block_b, out_dtype=out_dtype)
    return out_t.T


def _init_params(key):
    # Deterministic synthetic init mirroring nn.Linear's uniform(-1/sqrt(fan_in), +1/sqrt(fan_in)),
    # with PyTorch's (out_features, in_features) weight layout.
    k1, k2, k3, k4 = jax.random.split(key, 4)
    lim1 = 1.0 / jnp.sqrt(3.0)
    lim2 = 1.0 / jnp.sqrt(18.0)
    w1 = jax.random.uniform(k1, (18, 3), jnp.float32, -lim1, lim1)
    b1 = jax.random.uniform(k2, (18,), jnp.float32, -lim1, lim1)
    w2 = jax.random.uniform(k3, (6, 18), jnp.float32, -lim2, lim2)
    b2 = jax.random.uniform(k4, (6,), jnp.float32, -lim2, lim2)
    return w1, b1, w2, b2


def _reference(x, w1, b1, w2, b2):
    h = jnp.maximum(x.astype(jnp.float32) @ w1.T + b1, 0.0)
    return h @ w2.T + b2


if __name__ == "__main__":
    key = jax.random.PRNGKey(0)
    kx, kp = jax.random.split(key)
    w1, b1, w2, b2 = _init_params(kp)

    # bf16 MXU operands => ~1e-2 relative error vs the pure-f32 reference.
    TOL = dict(atol=3e-2, rtol=3e-2)

    # 1) Tiny batch, single full-array block (no grid iteration).
    x_small = jax.random.normal(kx, (8, 3), jnp.float32)
    out_small = jax.block_until_ready(genre_encoder(x_small, w1, b1, w2, b2))
    ref_small = _reference(x_small, w1, b1, w2, b2)
    assert out_small.shape == (8, 6)
    assert jnp.allclose(out_small, ref_small, **TOL)

    # 2) Ragged batch exercising the pipelined grid (3 steps of 128, last block partial)
    #    and masked tail writes -- no whole-array padding.
    x_rag = jax.random.normal(kx, (300, 3), jnp.float32)
    out_rag = jax.block_until_ready(genre_encoder(x_rag, w1, b1, w2, b2, block_b=128))
    ref_rag = _reference(x_rag, w1, b1, w2, b2)
    assert out_rag.shape == (300, 6)
    assert jnp.allclose(out_rag, ref_rag, **TOL)

    # 3) Lane-dense entry point (preferred layout: no wrapper transposes).
    x_t = jax.random.normal(kx, (3, 512), jnp.float32)
    out_t = jax.block_until_ready(genre_encoder_t(x_t, w1, b1, w2, b2, block_b=128))
    ref_t = _reference(x_t.T, w1, b1, w2, b2).T
    assert out_t.shape == (6, 512)
    assert jnp.allclose(out_t, ref_t, **TOL)

    # 4) bf16 I/O fast path (halves HBM bytes of this bandwidth-bound kernel).
    x_bf16 = x_rag.astype(jnp.bfloat16)
    out_bf16 = jax.block_until_ready(genre_encoder(x_bf16, w1, b1, w2, b2, block_b=128))
    ref_bf16 = _reference(x_bf16.astype(jnp.float32), w1, b1, w2, b2)
    assert out_bf16.dtype == jnp.bfloat16
    assert jnp.allclose(out_bf16.astype(jnp.float32), ref_bf16, atol=5e-2, rtol=5e-2)

    print("KERNEL_OK")
</pallas_src>

<mosaic_0001>
module attributes {stable_mosaic.version = 11 : i64} {
  func.func @_genre_encoder_kernel(%arg0: i32, %arg1: memref<3x8xf32, #tpu.memory_space<vmem>>, %arg2: memref<18x3xbf16, #tpu.memory_space<vmem>>, %arg3: memref<18x1xf32, #tpu.memory_space<vmem>>, %arg4: memref<6x18xbf16, #tpu.memory_space<vmem>>, %arg5: memref<6x1xf32, #tpu.memory_space<vmem>>, %arg6: memref<6x8xf32, #tpu.memory_space<vmem>>) attributes {dimension_semantics = [#tpu.dimension_semantics<parallel>], iteration_bounds = array<i64: 1>, scalar_prefetch = 0 : i64, scratch_operands = 0 : i64, tpu.core_type = #tpu.core_type<tc>, window_params = [{transform_indices = @transform_0, window_bounds = array<i64: 3, 8>}, {pipeline_mode = #tpu.pipeline_mode<synchronous>, transform_indices = @transform_1, window_bounds = array<i64: 18, 3>}, {pipeline_mode = #tpu.pipeline_mode<synchronous>, transform_indices = @transform_2, window_bounds = array<i64: 18, 1>}, {pipeline_mode = #tpu.pipeline_mode<synchronous>, transform_indices = @transform_3, window_bounds = array<i64: 6, 18>}, {pipeline_mode = #tpu.pipeline_mode<synchronous>, transform_indices = @transform_4, window_bounds = array<i64: 6, 1>}, {transform_indices = @transform_5, window_bounds = array<i64: 6, 8>}]} {
    %c0 = arith.constant 0 : index
    %c0_0 = arith.constant 0 : index
    %0 = vector.load %arg1[%c0, %c0_0] : memref<3x8xf32, #tpu.memory_space<vmem>>, vector<3x8xf32>
    %1 = arith.truncf %0 : vector<3x8xf32> to vector<3x8xbf16>
    %c0_1 = arith.constant 0 : index
    %c0_2 = arith.constant 0 : index
    %2 = vector.load %arg2[%c0_1, %c0_2] : memref<18x3xbf16, #tpu.memory_space<vmem>>, vector<18x3xbf16>
    %cst = arith.constant dense<0.000000e+00> : vector<18x8xf32>
    %3 = tpu.matmul %2, %1, %cst {dimension_numbers = #tpu.dot_dimension_numbers<[1], [0], [0], [1], [0, 0, 1, 1], [], []>} : vector<18x3xbf16>, vector<3x8xbf16>, vector<18x8xf32> -> vector<18x8xf32>
    %c0_3 = arith.constant 0 : index
    %c0_4 = arith.constant 0 : index
    %4 = vector.load %arg3[%c0_3, %c0_4] : memref<18x1xf32, #tpu.memory_space<vmem>>, vector<18x1xf32>
    %5 = vector.broadcast %4 : vector<18x1xf32> to vector<18x8xf32>
    %6 = arith.addf %3, %5 : vector<18x8xf32>
    %cst_5 = arith.constant 0.000000e+00 : f32
    %7 = vector.broadcast %cst_5 : f32 to vector<18x8xf32>
    %8 = arith.maximumf %6, %7 : vector<18x8xf32>
    %c0_6 = arith.constant 0 : index
    %c0_7 = arith.constant 0 : index
    %9 = vector.load %arg4[%c0_6, %c0_7] : memref<6x18xbf16, #tpu.memory_space<vmem>>, vector<6x18xbf16>
    %10 = arith.truncf %8 : vector<18x8xf32> to vector<18x8xbf16>
    %cst_8 = arith.constant dense<0.000000e+00> : vector<6x8xf32>
    %11 = tpu.matmul %9, %10, %cst_8 {dimension_numbers = #tpu.dot_dimension_numbers<[1], [0], [0], [1], [0, 0, 1, 1], [], []>} : vector<6x18xbf16>, vector<18x8xbf16>, vector<6x8xf32> -> vector<6x8xf32>
    %c0_9 = arith.constant 0 : index
    %c0_10 = arith.constant 0 : index
    %12 = vector.load %arg5[%c0_9, %c0_10] : memref<6x1xf32, #tpu.memory_space<vmem>>, vector<6x1xf32>
    %13 = vector.broadcast %12 : vector<6x1xf32> to vector<6x8xf32>
    %14 = arith.addf %11, %13 : vector<6x8xf32>
    %c0_11 = arith.constant 0 : index
    %c0_12 = arith.constant 0 : index
    %15 = vector.load %arg6[%c0_11, %c0_12] : memref<6x8xf32, #tpu.memory_space<vmem>>, vector<6x8xf32>
    tpu.vector_store %arg6[%c0_11, %c0_12], %14 {strides = array<i32>} : memref<6x8xf32, #tpu.memory_space<vmem>>, vector<6x8xf32>,
    return
  }
  func.func @transform_0(%arg0: i32) -> (i32, i32) {
    %c0_i32 = arith.constant 0 : i32
    %c0_i32_0 = arith.constant 0 : i32
    return %c0_i32, %arg0 : i32, i32
  }
  func.func @transform_1(%arg0: i32) -> (i32, i32) {
    %c0_i32 = arith.constant 0 : i32
    %c0_i32_0 = arith.constant 0 : i32
    %c0_i32_1 = arith.constant 0 : i32
    return %c0_i32, %c0_i32_0 : i32, i32
  }
  func.func @transform_2(%arg0: i32) -> (i32, i32) {
    %c0_i32 = arith.constant 0 : i32
    %c0_i32_0 = arith.constant 0 : i32
    %c0_i32_1 = arith.constant 0 : i32
    return %c0_i32, %c0_i32_0 : i32, i32
  }
  func.func @transform_3(%arg0: i32) -> (i32, i32) {
    %c0_i32 = arith.constant 0 : i32
    %c0_i32_0 = arith.constant 0 : i32
    %c0_i32_1 = arith.constant 0 : i32
    return %c0_i32, %c0_i32_0 : i32, i32
  }
  func.func @transform_4(%arg0: i32) -> (i32, i32) {
    %c0_i32 = arith.constant 0 : i32
    %c0_i32_0 = arith.constant 0 : i32
    %c0_i32_1 = arith.constant 0 : i32
    return %c0_i32, %c0_i32_0 : i32, i32
  }
  func.func @transform_5(%arg0: i32) -> (i32, i32) {
    %c0_i32 = arith.constant 0 : i32
    %c0_i32_0 = arith.constant 0 : i32
    return %c0_i32, %arg0 : i32, i32
  }
}

</mosaic_0001>

<llo_original>
// kernel: genre_encoder.1
$region0: #{genre_encoder.1}
  #allocation0 [shape = 'u32[]', space=smem, size = 0x4, offset = 0x4, fixed_abs, tag = 'smem constant byte address 0x4 - core index']
  #allocation1 [shape = 'u32[144,128]{1,0:T(1,128)}', space=vmem, size = 0x12000, scoped, tag = 'internal scratch']
  %s0 = inlined_call_operand.vmem [shape: f32[3,8], index: 0, kind: input, shape index: {}]
  %s1 = inlined_call_operand.vmem [shape: bf16[18,3], index: 1, kind: input, shape index: {}]
  %s2 = inlined_call_operand.vmem [shape: f32[18,1], index: 2, kind: input, shape index: {}]
  %s3 = inlined_call_operand.vmem [shape: bf16[6,18], index: 3, kind: input, shape index: {}]
  %s4 = inlined_call_operand.vmem [shape: f32[6,1], index: 4, kind: input, shape index: {}]
  %s5 = inlined_call_operand.vmem [shape: f32[6,8], index: 5, kind: output, shape index: {}]
  %s6 = sld [smem:[#allocation0]]
  $region30: #{genre_encoder.1} parent=0
    _
  %s8 = ssub.s32 1, %s6
  %s9 = scalar_select 0, %s8, %s6
  // Predicated region
  $region2: #{genre_encoder.1} parent=0 // pred_check
    _
  $region3: #{genre_encoder.1} parent=0 // pred_check_branch
    %11 = sbr.rel (0) target = $region5
  $region4: #{genre_encoder.1} parent=0 // pred_region
    _
  $region5: #{genre_encoder.1} parent=0 // pred_fallthru
    _
  // Predicated region
  $region6: #{genre_encoder.1} parent=0 // pred_check
    _
  $region7: #{genre_encoder.1} parent=0 // pred_check_branch
    %13 = sbr.rel (0) target = $region9
  $region8: #{genre_encoder.1} parent=0 // pred_region
    _
  $region9: #{genre_encoder.1} parent=0 // pred_fallthru
    _
  // Predicated region
  $region10: #{genre_encoder.1} parent=0 // pred_check
    _
  $region11: #{genre_encoder.1} parent=0 // pred_check_branch
    %15 = sbr.rel (0) target = $region13
  $region12: #{genre_encoder.1} parent=0 // pred_region
    _
  $region13: #{genre_encoder.1} parent=0 // pred_fallthru
    _
  // Predicated region
  $region14: #{genre_encoder.1} parent=0 // pred_check
    _
  $region15: #{genre_encoder.1} parent=0 // pred_check_branch
    %17 = sbr.rel (0) target = $region17
  $region16: #{genre_encoder.1} parent=0 // pred_region
    _
  $region17: #{genre_encoder.1} parent=0 // pred_fallthru
    _
  // Predicated region
  $region18: #{genre_encoder.1} parent=0 // pred_check
    _
  $region19: #{genre_encoder.1} parent=0 // pred_check_branch
    %19 = sbr.rel (0) target = $region21
  $region20: #{genre_encoder.1} parent=0 // pred_region
    _
  $region21: #{genre_encoder.1} parent=0 // pred_fallthru
    _
  %v21 = vld [vmem:[%s0] sm:$0x7]
  %v22 = vpack.c.bf16 %v21, %v21
  %v23 = vld [vmem:[%s1] sm:$0xf]
  %v24 = vld [vmem:[%s1 + $0x4] sm:$0xf]
  %v25 = vld [vmem:[%s1 + $0x8] sm:$0x1]
  %v26 = vld [vmem:[%s2] sm:$0xff]
  %v27 = vld [vmem:[%s2 + $0x8] sm:$0xff]
  %v28 = vld [vmem:[%s2 + $0x10] sm:$0x3]
  %30 = vset.pattern.permute.xlu0 0
  %31 = vperm.xlu0 %30, %v26
  %v32 = vpop.permute.xlu0 %31
  %35 = vset.pattern.permute.xlu0 0
  %36 = vperm.xlu0 %35, %v27
  %v37 = vpop.permute.xlu0 %36
  %40 = vset.pattern.permute.xlu0 0
  %41 = vperm.xlu0 %40, %v28
  %v42 = vpop.permute.xlu0 %41
  %v47 = vunpack.c.l.b16 %v23
  %v48 = vunpack.c.l.b16 %v24
  %v49 = vunpack.c.l.b16 %v25
  %v50 = vpack.c.b16 %v48, %v47
  %v51 = vpack.c.b16 %v49, %v49
  %vm52 = vcmask 23552
  %v54 = vsel %vm52, %v50, 0
  %v57 = vsel %vm52, %v51, 0
  %vm59 = vcmask 1040384
  %vm60 = vcmask 1041408
  %v61 = vsel %vm59, 4294967295, 65535
  %v62 = vsel %vm60, %v61, 0
  %v64 = vand.u32 %v22, %v62
  %66 = vmatprep.subr.bf16.mxu0 0
  %67 = vmatpush1.bf16.msra.mxu0 %v64
  %68 = vmatprep.subr.bf16.mxu0 0
  %69 = vmatpush1.bf16.msra.mxu0 0
  %70 = vmatprep.subr.bf16.mxu0 0
  %71 = vmatpush1.bf16.msra.mxu0 0
  %72 = vmatprep.subr.bf16.mxu0 0
  %73 = vmatpush1.bf16.msra.mxu0 0
  %74 = vmatprep.subr.bf16.mxu0 0
  %75 = vmatpush1.bf16.msra.mxu0 0
  %76 = vmatprep.subr.bf16.mxu0 0
  %77 = vmatpush1.bf16.msra.mxu0 0
  %78 = vmatprep.subr.bf16.mxu0 0
  %79 = vmatpush1.bf16.msra.mxu0 0
  %80 = vmatprep.subr.bf16.mxu0 0
  %81 = vmatpush1.bf16.msra.mxu0 0
  %82 = vmatprep.subr.bf16.mxu0 0
  %83 = vmatpush1.bf16.msra.mxu0 0
  %84 = vmatprep.subr.bf16.mxu0 0
  %85 = vmatpush1.bf16.msra.mxu0 0
  %86 = vmatprep.subr.bf16.mxu0 0
  %87 = vmatpush1.bf16.msra.mxu0 0
  %88 = vmatprep.subr.bf16.mxu0 0
  %89 = vmatpush1.bf16.msra.mxu0 0
  %90 = vmatprep.subr.bf16.mxu0 0
  %91 = vmatpush1.bf16.msra.mxu0 0
  %92 = vmatprep.subr.bf16.mxu0 0
  %93 = vmatpush1.bf16.msra.mxu0 0
  %94 = vmatprep.subr.bf16.mxu0 0
  %95 = vmatpush1.bf16.msra.mxu0 0
  %96 = vmatprep.subr.bf16.mxu0 0
  %97 = vmatpush1.bf16.msra.mxu0 0
  %98 = vmatprep.mubr.bf16.mxu0 0
  %99 = vmatmul.mubr.bf16.gmra.mrb[0].mxu0 %v54
  %v100 = vpop.f32.mrb[0].mxu0
  %v101 = vadd.f32 %v32, %v100
  %v102 = vpop.f32.mrb[0].mxu0
  %v103 = vpop.f32.mrb[0].mxu0
  %v104 = vadd.f32 %v37, %v103
  %v105 = vpop.f32.mrb[0].mxu0
  %106 = vmatprep.mubr.bf16.mxu0 0
  %107 = vmatmul.mubr.bf16.gmra.mrb[0].mxu0 %v57
  %v108 = vpop.f32.mrb[0].mxu0
  %v109 = vadd.f32 %v42, %v108
  %v110 = vpop.f32.mrb[0].mxu0
  %v111 = vpop.f32.mrb[0].mxu0
  %v112 = vpop.f32.mrb[0].mxu0
  %113 = vdwg.mxu0
  %v114 = vmax.f32 %v101, 0.0
  %v115 = vmax.f32 %v104, 0.0
  %v116 = vmax.f32 %v109, 0.0
  %v117 = vld [vmem:[%s3] sm:$0x7]
  %v118 = vpack.c.bf16 %v115, %v114
  %v119 = vpack.c.bf16 %v116, %v116
  %v120 = vld [vmem:[%s4] sm:$0x3f]
  %122 = vset.pattern.permute.xlu0 0
  %123 = vperm.xlu0 %122, %v120
  %v124 = vpop.permute.xlu0 %123
  %vm126 = vcmask 146432
  %v128 = vsel %vm126, %v117, 0
  %v131 = vsel %vm59, %v119, 0
  %133 = vmatprep.subr.bf16.mxu0 0
  %134 = vmatpush1.bf16.msra.mxu0 %v118
  %135 = vmatprep.subr.bf16.mxu0 0
  %136 = vmatpush1.bf16.msra.mxu0 %v131
  %137 = vmatprep.subr.bf16.mxu0 0
  %138 = vmatpush1.bf16.msra.mxu0 0
  %139 = vmatprep.subr.bf16.mxu0 0
  %140 = vmatpush1.bf16.msra.mxu0 0
  %141 = vmatprep.subr.bf16.mxu0 0
  %142 = vmatpush1.bf16.msra.mxu0 0
  %143 = vmatprep.subr.bf16.mxu0 0
  %144 = vmatpush1.bf16.msra.mxu0 0
  %145 = vmatprep.subr.bf16.mxu0 0
  %146 = vmatpush1.bf16.msra.mxu0 0
  %147 = vmatprep.subr.bf16.mxu0 0
  %148 = vmatpush1.bf16.msra.mxu0 0
  %149 = vmatprep.subr.bf16.mxu0 0
  %150 = vmatpush1.bf16.msra.mxu0 0
  %151 = vmatprep.subr.bf16.mxu0 0
  %152 = vmatpush1.bf16.msra.mxu0 0
  %153 = vmatprep.subr.bf16.mxu0 0
  %154 = vmatpush1.bf16.msra.mxu0 0
  %155 = vmatprep.subr.bf16.mxu0 0
  %156 = vmatpush1.bf16.msra.mxu0 0
  %157 = vmatprep.subr.bf16.mxu0 0
  %158 = vmatpush1.bf16.msra.mxu0 0
  %159 = vmatprep.subr.bf16.mxu0 0
  %160 = vmatpush1.bf16.msra.mxu0 0
  %161 = vmatprep.subr.bf16.mxu0 0
  %162 = vmatpush1.bf16.msra.mxu0 0
  %163 = vmatprep.subr.bf16.mxu0 0
  %164 = vmatpush1.bf16.msra.mxu0 0
  %165 = vmatprep.mubr.bf16.mxu0 0
  %166 = vmatmul.mubr.bf16.gmra.mrb[0].mxu0 %v128
  %v167 = vpop.f32.mrb[0].mxu0
  %v168 = vadd.f32 %v124, %v167
  %v169 = vpop.f32.mrb[0].mxu0
  %v170 = vpop.f32.mrb[0].mxu0
  %v171 = vpop.f32.mrb[0].mxu0
  %172 = vdwg.mxu0
  %vm173 = vcmask 62464
  %174 = vst.msk [vmem:[%s5] sm:$0x3f] %vm173, %v168
  // Predicated region
  $region22: #{genre_encoder.1} parent=0 // pred_check
    _
  $region23: #{genre_encoder.1} parent=0 // pred_check_branch
    %176 = sbr.rel (0) target = $region25
  $region24: #{genre_encoder.1} parent=0 // pred_region
    _
  $region25: #{genre_encoder.1} parent=0 // pred_fallthru
    _
  // Predicated region
  $region26: #{genre_encoder.1} parent=0 // pred_check
    _
  $region27: #{genre_encoder.1} parent=0 // pred_check_branch
    %178 = sbr.rel (0) target = $region29
  $region28: #{genre_encoder.1} parent=0 // pred_region
    _
  $region29: #{genre_encoder.1} parent=0 // pred_fallthru
    _

</llo_original>
